<compile_context>
chip_gen: v7x
topology: tpu7x:2x2x1
jax: 0.10.0
libtpu: 0.0.40
codegen_flags: <defaults>
</compile_context>

<pallas_src>
import functools

import jax
import jax.numpy as jnp
from jax.experimental import pallas as pl
from jax.experimental.pallas import tpu as pltpu

_LANE = 128
_MAX_COLS = 8192
_PALLAS_MIN_BYTES = 4 * 1024 * 1024   # below this, always use jnp.reshape
_MIN_SPLIT_BYTES = 1 * 1024 * 1024    # split single-block case above this


def _copy_kernel(x_ref, o_ref):
    # A view is a reinterpretation of the same contiguous bytes; the only
    # "compute" is data movement.
    o_ref[...] = x_ref[...]


def _sublane(itemsize):
    # Native packed sublane count: 8 for 4-byte, 16 for 2-byte, 32 for 1-byte.
    return max(8, 32 // int(itemsize))


def _pick_block_bytes():
    """Generation-aware target block size (keeps 4 buffers under scoped VMEM)."""
    try:
        kind = jax.devices()[0].device_kind.lower()
    except Exception:  # pragma: no cover - no accelerator visible
        return 3 * 1024 * 1024
    if "v5" in kind or "v4" in kind:
        return 3 * 1024 * 1024     # 12 MiB footprint < 16 MiB scoped default
    return 6 * 1024 * 1024         # v6e / v7x: 24 MiB footprint < 32 MiB default


def _plan_slab(total, itemsize):
    """Pick (rows, cols, tile_rows, grid_rows) for a lane-dense copy of `total` elems."""
    # Largest multiple-of-128 divisor of `total` that is <= _MAX_COLS.
    cols = _LANE
    for cand in range(min(_MAX_COLS, total), _LANE - 1, -_LANE):
        if total % cand == 0:
            cols = cand
            break
    rows = total // cols

    sub = _sublane(itemsize)
    block_bytes = _pick_block_bytes()
    tile_rows = max(sub, (block_bytes // (cols * itemsize)) // sub * sub)

    if tile_rows >= rows:
        # One block would cover everything.  If the array is big enough and
        # splittable, use >= 2 blocks so both v7x TensorCores participate.
        if rows >= 2 * sub and rows * cols * itemsize >= _MIN_SPLIT_BYTES:
            half = pl.cdiv(rows, 2)
            tile_rows = pl.cdiv(half, sub) * sub
            return rows, cols, tile_rows, pl.cdiv(rows, tile_rows)
        # Single block covering the full slab (block == full array dims is
        # legal even if rows is not a multiple of the packed sublane count).
        return rows, cols, rows, 1

    # Partial final block (rows % tile_rows != 0) is masked by Pallas.
    return rows, cols, tile_rows, pl.cdiv(rows, tile_rows)


@functools.partial(
    jax.jit,
    static_argnames=("out_shape", "rows", "cols", "tile_rows", "grid_rows"),
)
def _view_via_pallas(x, *, out_shape, rows, cols, tile_rows, grid_rows):
    slab = jnp.reshape(x, (rows, cols))  # contiguous reshape: bitcast inside XLA
    itemsize = jnp.dtype(slab.dtype).itemsize
    out = pl.pallas_call(
        _copy_kernel,
        out_shape=jax.ShapeDtypeStruct((rows, cols), slab.dtype),
        grid=(grid_rows,),
        in_specs=[pl.BlockSpec((tile_rows, cols), lambda i: (i, 0))],
        out_specs=pl.BlockSpec((tile_rows, cols), lambda i: (i, 0)),
        cost_estimate=pl.CostEstimate(
            flops=0,
            transcendentals=0,
            bytes_accessed=2 * rows * cols * itemsize,
        ),
        compiler_params=pltpu.CompilerParams(
            dimension_semantics=("parallel",),   # v7x: shard grid over 2 TCs
            vmem_limit_bytes=32 << 20,           # ample headroom on all gens
        ),
    )(slab)
    return jnp.reshape(out, out_shape)


class ViewOP:
    """JAX/Pallas equivalent of the PyTorch ViewOP module: input.view(*shape)."""

    def __init__(self, *shape, force_pallas=False):
        self.shape = shape
        self.force_pallas = force_pallas

    def __call__(self, x):
        total = 1
        for d in x.shape:
            total *= d

        # Resolve a single -1 with torch.view semantics (with divisibility check).
        shape = list(self.shape)
        neg = [i for i, d in enumerate(shape) if d == -1]
        if len(neg) > 1:
            raise ValueError("only one dimension can be inferred (-1)")
        if neg:
            known = 1
            for d in shape:
                if d != -1:
                    known *= d
            if known == 0 or total % known != 0:
                raise ValueError(
                    f"cannot view array of size {total} as shape {tuple(self.shape)}"
                )
            shape[neg[0]] = total // known
        shape = tuple(int(d) for d in shape)

        out_total = 1
        for d in shape:
            out_total *= d
        if out_total != total:
            raise ValueError(
                f"view shape {shape} is incompatible with input of size {total}"
            )

        itemsize = jnp.dtype(x.dtype).itemsize
        nbytes = total * itemsize

        # A view is metadata-only: the default path is a free reshape.  The
        # Pallas copy is the exception (large lane-aligned buffers, or forced).
        if (
            total == 0
            or total % _LANE != 0
            or (not self.force_pallas and nbytes < _PALLAS_MIN_BYTES)
        ):
            return jnp.reshape(x, shape)

        rows, cols, tile_rows, grid_rows = _plan_slab(total, itemsize)
        return _view_via_pallas(
            x,
            out_shape=shape,
            rows=rows,
            cols=cols,
            tile_rows=tile_rows,
            grid_rows=grid_rows,
        )


if __name__ == "__main__":
    key = jax.random.PRNGKey(0)
    # Small NCHW input consistent with a CNN feature map: (2, 4, 16, 16).
    x = jax.random.normal(key, (2, 4, 16, 16), dtype=jnp.float32)

    # 1) Default path: metadata-only reshape (the common/fast case).
    y = ViewOP(2, -1)(x)
    y = jax.block_until_ready(y)
    assert y.shape == (2, 1024)
    assert y.dtype == x.dtype
    assert bool(jnp.array_equal(y, jnp.reshape(x, (2, 1024))))

    # 2) Forced Pallas path: exercises the lane-dense identity-copy kernel.
    yk = ViewOP(2, -1, force_pallas=True)(x)
    yk = jax.block_until_ready(yk)
    assert yk.shape == (2, 1024)
    assert bool(jnp.array_equal(yk, jnp.reshape(x, (2, 1024))))

    # 3) Forced Pallas path with bf16 (dtype-aware sublane planning) and a
    #    multi-dim target shape with an inferred dimension.
    xb = jax.random.normal(jax.random.PRNGKey(1), (4, 8, 32, 32), dtype=jnp.bfloat16)
    yb = ViewOP(4, -1, 64, force_pallas=True)(xb)
    yb = jax.block_until_ready(yb)
    assert yb.shape == (4, 128, 64)
    assert yb.dtype == xb.dtype
    assert bool(jnp.array_equal(yb, jnp.reshape(xb, (4, 128, 64))))

    print("KERNEL_OK")
</pallas_src>

<mosaic_0001>
module attributes {stable_mosaic.version = 11 : i64} {
  func.func @_copy_kernel(%arg0: i32, %arg1: memref<1x2048xf32, #tpu.memory_space<vmem>>, %arg2: memref<1x2048xf32, #tpu.memory_space<vmem>>) attributes {dimension_semantics = [#tpu.dimension_semantics<parallel>], iteration_bounds = array<i64: 1>, scalar_prefetch = 0 : i64, scratch_operands = 0 : i64, tpu.core_type = #tpu.core_type<tc>, window_params = [{transform_indices = @transform_0, window_bounds = array<i64: 1, 2048>}, {transform_indices = @transform_1, window_bounds = array<i64: 1, 2048>}]} {
    %c0 = arith.constant 0 : index
    %c0_0 = arith.constant 0 : index
    %0 = vector.load %arg1[%c0, %c0_0] : memref<1x2048xf32, #tpu.memory_space<vmem>>, vector<1x2048xf32>
    %c0_1 = arith.constant 0 : index
    %c0_2 = arith.constant 0 : index
    %1 = vector.load %arg2[%c0_1, %c0_2] : memref<1x2048xf32, #tpu.memory_space<vmem>>, vector<1x2048xf32>
    tpu.vector_store %arg2[%c0_1, %c0_2], %0 {strides = array<i32>} : memref<1x2048xf32, #tpu.memory_space<vmem>>, vector<1x2048xf32>,
    return
  }
  func.func @transform_0(%arg0: i32) -> (i32, i32) {
    %c0_i32 = arith.constant 0 : i32
    %c0_i32_0 = arith.constant 0 : i32
    return %arg0, %c0_i32 : i32, i32
  }
  func.func @transform_1(%arg0: i32) -> (i32, i32) {
    %c0_i32 = arith.constant 0 : i32
    %c0_i32_0 = arith.constant 0 : i32
    return %arg0, %c0_i32 : i32, i32
  }
}

</mosaic_0001>

<llo_original>
// kernel: _view_via_pallas.1
$region0: #{_view_via_pallas.1}
  #allocation0 [shape = 'u32[]', space=smem, size = 0x4, offset = 0x4, fixed_abs, tag = 'smem constant byte address 0x4 - core index']
  #allocation1 [shape = 'u32[144,128]{1,0:T(1,128)}', space=vmem, size = 0x12000, scoped, tag = 'internal scratch']
  %s0 = inlined_call_operand.vmem [shape: f32[1,2048], index: 0, kind: input, shape index: {}]
  %s1 = inlined_call_operand.vmem [shape: f32[1,2048], index: 1, kind: output, shape index: {}]
  %s2 = sld [smem:[#allocation0]]
  $region14: #{_view_via_pallas.1} parent=0
    _
  %s4 = ssub.s32 1, %s2
  %s5 = scalar_select 0, %s4, %s2
  // Predicated region
  $region2: #{_view_via_pallas.1} parent=0 // pred_check
    _
  $region3: #{_view_via_pallas.1} parent=0 // pred_check_branch
    %7 = sbr.rel (0) target = $region5
  $region4: #{_view_via_pallas.1} parent=0 // pred_region
    _
  $region5: #{_view_via_pallas.1} parent=0 // pred_fallthru
    _
  %v8 = vld [vmem:[%s0] sm:$0xff]
  %v9 = vld [vmem:[%s0 + $0x8] sm:$0xff]
  %10 = vst [vmem:[%s1] sm:$0xff] %v8
  %11 = vst [vmem:[%s1 + $0x8] sm:$0xff] %v9
  // Predicated region
  $region6: #{_view_via_pallas.1} parent=0 // pred_check
    _
  $region7: #{_view_via_pallas.1} parent=0 // pred_check_branch
    %13 = sbr.rel (0) target = $region9
  $region8: #{_view_via_pallas.1} parent=0 // pred_region
    _
  $region9: #{_view_via_pallas.1} parent=0 // pred_fallthru
    _
  // Predicated region
  $region10: #{_view_via_pallas.1} parent=0 // pred_check
    _
  $region11: #{_view_via_pallas.1} parent=0 // pred_check_branch
    %15 = sbr.rel (0) target = $region13
  $region12: #{_view_via_pallas.1} parent=0 // pred_region
    _
  $region13: #{_view_via_pallas.1} parent=0 // pred_fallthru
    _

</llo_original>
